<compile_context>
chip_gen: v6e
topology: v6e:2x2x1
jax: 0.10.0
libtpu: 0.0.40
codegen_flags: <defaults>
</compile_context>

<pallas_src>
import jax
import jax.numpy as jnp
from jax.experimental import pallas as pl
from jax.experimental.pallas import tpu as pltpu

LANE = 128        # lane padding for the hidden feature dims (64/32/16 -> 128)
MAX_TILE_B = 2048 # keeps double-buffered tiles comfortably inside v5e's 16 MiB


def _round_up(n, m):
    return ((n + m - 1) // m) * m


def qnetwork_kernel(x_ref,
                    w1_ref, b1_ref,
                    w2_ref, b2_ref,
                    w3_ref, b3_ref,
                    w4_ref, b4_ref,
                    out_ref):
    """Fused forward: relu(xW1+b1) -> relu(.W2+b2) -> relu(.W3+b3) -> .W4+b4.

    x tile:   [tile_b, state_size] f32 (cast to bf16 here, not on the host)
    w1:       [state_size, 128] bf16        b1..b3: [1, 128] f32
    w2, w3:   [128, 128]        bf16        w4:     [128, action_size] bf16
    b4:       [1, action_size]  f32         out:    [tile_b, action_size] f32
    Accumulation is f32 on the MXU; hidden activations re-cast to bf16.
    """
    h = x_ref[...].astype(jnp.bfloat16)

    h = jnp.dot(h, w1_ref[...], preferred_element_type=jnp.float32) + b1_ref[...]
    h = jnp.maximum(h, 0.0).astype(jnp.bfloat16)

    h = jnp.dot(h, w2_ref[...], preferred_element_type=jnp.float32) + b2_ref[...]
    h = jnp.maximum(h, 0.0).astype(jnp.bfloat16)

    h = jnp.dot(h, w3_ref[...], preferred_element_type=jnp.float32) + b3_ref[...]
    h = jnp.maximum(h, 0.0).astype(jnp.bfloat16)

    h = jnp.dot(h, w4_ref[...], preferred_element_type=jnp.float32) + b4_ref[...]

    out_ref[...] = h.astype(out_ref.dtype)  # narrow [tile_b, action_size] f32


def _pad2d(x, rows, cols):
    return jnp.pad(x, ((0, rows - x.shape[0]), (0, cols - x.shape[1])))


def prepare_params(params):
    """One-time weight prep (hoisted out of the forward path).

    Hidden dims are zero-padded to 128 lanes; w1 keeps its natural
    [state_size, 128] shape and w4/b4 keep the natural action_size width.
    Zero padding is exact: padded lanes stay 0 through every ReLU.
    """
    state_size = params["w1"].shape[0]
    action_size = params["w4"].shape[1]
    assert state_size <= LANE and action_size <= LANE
    return {
        "w1": _pad2d(params["w1"], state_size, LANE).astype(jnp.bfloat16),
        "b1": _pad2d(params["b1"], 1, LANE).astype(jnp.float32),
        "w2": _pad2d(params["w2"], LANE, LANE).astype(jnp.bfloat16),
        "b2": _pad2d(params["b2"], 1, LANE).astype(jnp.float32),
        "w3": _pad2d(params["w3"], LANE, LANE).astype(jnp.bfloat16),
        "b3": _pad2d(params["b3"], 1, LANE).astype(jnp.float32),
        "w4": _pad2d(params["w4"], LANE, action_size).astype(jnp.bfloat16),
        "b4": params["b4"].astype(jnp.float32),
    }


def _choose_tile_b(B):
    """Large tiles to amortize the ~0.35us/step cost, but >=2 grid steps when
    B allows it so both v7x TensorCores get a share of the batch."""
    if B <= 8:
        return B                       # single full-array block (B == full dim)
    b8 = _round_up(B, 8)
    half = _round_up((b8 + 1) // 2, 8)  # guarantees grid >= 2 when B > 8
    return max(8, min(MAX_TILE_B, half))


def qnetwork_forward(state, prepared, *, tile_b=None):
    """Fused QNetwork forward.

    state:    [B, state_size] float32 (unpadded, passed straight to the kernel)
    prepared: output of prepare_params() (call it once per parameter set)
    returns:  [B, action_size] float32 Q-values (no padded lanes, no slicing)
    """
    B, state_size = state.shape
    action_size = prepared["w4"].shape[1]
    assert prepared["w1"].shape[0] == state_size

    if tile_b is None:
        tile_b = _choose_tile_b(B)
    grid = (pl.cdiv(B, tile_b),)  # ragged last block is masked by Pallas

    x_spec = pl.BlockSpec((tile_b, state_size), lambda i: (i, 0))   # pipelined
    w1_spec = pl.BlockSpec((state_size, LANE), lambda i: (0, 0))    # VMEM-resident
    w_spec = pl.BlockSpec((LANE, LANE), lambda i: (0, 0))
    b_spec = pl.BlockSpec((1, LANE), lambda i: (0, 0))
    w4_spec = pl.BlockSpec((LANE, action_size), lambda i: (0, 0))
    b4_spec = pl.BlockSpec((1, action_size), lambda i: (0, 0))
    out_spec = pl.BlockSpec((tile_b, action_size), lambda i: (i, 0))

    return pl.pallas_call(
        qnetwork_kernel,
        out_shape=jax.ShapeDtypeStruct((B, action_size), jnp.float32),
        grid=grid,
        in_specs=[x_spec,
                  w1_spec, b_spec,
                  w_spec, b_spec,
                  w_spec, b_spec,
                  w4_spec, b4_spec],
        out_specs=out_spec,
        compiler_params=pltpu.CompilerParams(
            dimension_semantics=("parallel",)),  # megacore batch split on v7x
    )(state,
      prepared["w1"], prepared["b1"],
      prepared["w2"], prepared["b2"],
      prepared["w3"], prepared["b3"],
      prepared["w4"], prepared["b4"])


def init_qnetwork_params(key, state_size, action_size, fc_1=64, fc_2=32, fc_3=16):
    """Deterministic init mimicking nn.Linear default: U(-1/sqrt(fan_in), +1/sqrt(fan_in))."""
    dims = [(state_size, fc_1), (fc_1, fc_2), (fc_2, fc_3), (fc_3, action_size)]
    params = {}
    for i, (fan_in, fan_out) in enumerate(dims, start=1):
        key, kw, kb = jax.random.split(key, 3)
        bound = 1.0 / (fan_in ** 0.5)
        # stored as [in, out] (transpose of PyTorch's [out, in]) so kernel does x @ W
        params[f"w{i}"] = jax.random.uniform(
            kw, (fan_in, fan_out), jnp.float32, minval=-bound, maxval=bound)
        params[f"b{i}"] = jax.random.uniform(
            kb, (1, fan_out), jnp.float32, minval=-bound, maxval=bound)
    return params


def qnetwork_reference_f32(state, params):
    """Pure-JAX full-f32 reference (matches the PyTorch module's math)."""
    x = jnp.maximum(state @ params["w1"] + params["b1"], 0.0)
    x = jnp.maximum(x @ params["w2"] + params["b2"], 0.0)
    x = jnp.maximum(x @ params["w3"] + params["b3"], 0.0)
    return x @ params["w4"] + params["b4"]


def qnetwork_reference_bf16(state, params):
    """Pure-JAX reference with the same bf16-operand / f32-accumulate precision."""
    h = state.astype(jnp.bfloat16)
    for i in (1, 2, 3):
        h = jnp.dot(h, params[f"w{i}"].astype(jnp.bfloat16),
                    preferred_element_type=jnp.float32) + params[f"b{i}"]
        h = jnp.maximum(h, 0.0).astype(jnp.bfloat16)
    h = jnp.dot(h, params["w4"].astype(jnp.bfloat16),
                preferred_element_type=jnp.float32) + params["b4"]
    return h


if __name__ == "__main__":
    key = jax.random.PRNGKey(0)
    k_params, k_state, k_state2 = jax.random.split(key, 3)

    state_size = 8
    action_size = 4

    params = init_qnetwork_params(k_params, state_size, action_size)
    prepared = prepare_params(params)          # one-time, outside the hot path

    fwd = jax.jit(qnetwork_forward)

    # Small batch (typical single-transition inference path).
    state_small = jax.random.normal(k_state, (2, state_size), jnp.float32)
    out_small = jax.block_until_ready(fwd(state_small, prepared))
    assert out_small.shape == (2, action_size)

    # Larger ragged batch: exercises multi-step grid (>=2 steps for megacore)
    # and the masked last block (1000 is not a multiple of the tile).
    state_big = jax.random.normal(k_state2, (1000, state_size), jnp.float32)
    out_big = jax.block_until_ready(fwd(state_big, prepared))
    assert out_big.shape == (1000, action_size)

    for s, o in ((state_small, out_small), (state_big, out_big)):
        # Precision-matched reference (bf16 operands, f32 accumulation).
        ref_bf16 = qnetwork_reference_bf16(s, params)
        assert jnp.allclose(o, ref_bf16, atol=1e-2, rtol=1e-2), \
            "mismatch vs bf16 reference"
        # Full-f32 PyTorch-equivalent reference (loose: bf16 rounding only).
        ref_f32 = qnetwork_reference_f32(s, params)
        assert jnp.allclose(o, ref_f32, atol=1e-1, rtol=1e-1), \
            "mismatch vs f32 reference"

    print("KERNEL_OK")
</pallas_src>

<mosaic_0001>
module attributes {stable_mosaic.version = 11 : i64} {
  func.func @qnetwork_kernel(%arg0: i32, %arg1: memref<2x8xf32, #tpu.memory_space<vmem>>, %arg2: memref<8x128xbf16, #tpu.memory_space<vmem>>, %arg3: memref<1x128xf32, #tpu.memory_space<vmem>>, %arg4: memref<128x128xbf16, #tpu.memory_space<vmem>>, %arg5: memref<1x128xf32, #tpu.memory_space<vmem>>, %arg6: memref<128x128xbf16, #tpu.memory_space<vmem>>, %arg7: memref<1x128xf32, #tpu.memory_space<vmem>>, %arg8: memref<128x4xbf16, #tpu.memory_space<vmem>>, %arg9: memref<1x4xf32, #tpu.memory_space<vmem>>, %arg10: memref<2x4xf32, #tpu.memory_space<vmem>>) attributes {dimension_semantics = [#tpu.dimension_semantics<parallel>], iteration_bounds = array<i64: 1>, scalar_prefetch = 0 : i64, scratch_operands = 0 : i64, tpu.core_type = #tpu.core_type<tc>, window_params = [{transform_indices = @transform_0, window_bounds = array<i64: 2, 8>}, {pipeline_mode = #tpu.pipeline_mode<synchronous>, transform_indices = @transform_1, window_bounds = array<i64: 8, 128>}, {pipeline_mode = #tpu.pipeline_mode<synchronous>, transform_indices = @transform_2, window_bounds = array<i64: 1, 128>}, {pipeline_mode = #tpu.pipeline_mode<synchronous>, transform_indices = @transform_3, window_bounds = array<i64: 128, 128>}, {pipeline_mode = #tpu.pipeline_mode<synchronous>, transform_indices = @transform_4, window_bounds = array<i64: 1, 128>}, {pipeline_mode = #tpu.pipeline_mode<synchronous>, transform_indices = @transform_5, window_bounds = array<i64: 128, 128>}, {pipeline_mode = #tpu.pipeline_mode<synchronous>, transform_indices = @transform_6, window_bounds = array<i64: 1, 128>}, {pipeline_mode = #tpu.pipeline_mode<synchronous>, transform_indices = @transform_7, window_bounds = array<i64: 128, 4>}, {pipeline_mode = #tpu.pipeline_mode<synchronous>, transform_indices = @transform_8, window_bounds = array<i64: 1, 4>}, {transform_indices = @transform_9, window_bounds = array<i64: 2, 4>}]} {
    %c0 = arith.constant 0 : index
    %c0_0 = arith.constant 0 : index
    %0 = vector.load %arg1[%c0, %c0_0] : memref<2x8xf32, #tpu.memory_space<vmem>>, vector<2x8xf32>
    %1 = arith.truncf %0 : vector<2x8xf32> to vector<2x8xbf16>
    %c0_1 = arith.constant 0 : index
    %c0_2 = arith.constant 0 : index
    %2 = vector.load %arg2[%c0_1, %c0_2] : memref<8x128xbf16, #tpu.memory_space<vmem>>, vector<8x128xbf16>
    %cst = arith.constant dense<0.000000e+00> : vector<2x128xf32>
    %3 = tpu.matmul %1, %2, %cst {dimension_numbers = #tpu.dot_dimension_numbers<[1], [0], [0], [1], [0, 0, 1, 1], [], []>} : vector<2x8xbf16>, vector<8x128xbf16>, vector<2x128xf32> -> vector<2x128xf32>
    %c0_3 = arith.constant 0 : index
    %c0_4 = arith.constant 0 : index
    %4 = vector.load %arg3[%c0_3, %c0_4] : memref<1x128xf32, #tpu.memory_space<vmem>>, vector<1x128xf32>
    %5 = vector.broadcast %4 : vector<1x128xf32> to vector<2x128xf32>
    %6 = arith.addf %3, %5 : vector<2x128xf32>
    %cst_5 = arith.constant 0.000000e+00 : f32
    %7 = vector.broadcast %cst_5 : f32 to vector<2x128xf32>
    %8 = arith.maximumf %6, %7 : vector<2x128xf32>
    %9 = arith.truncf %8 : vector<2x128xf32> to vector<2x128xbf16>
    %c0_6 = arith.constant 0 : index
    %c0_7 = arith.constant 0 : index
    %10 = vector.load %arg4[%c0_6, %c0_7] : memref<128x128xbf16, #tpu.memory_space<vmem>>, vector<128x128xbf16>
    %cst_8 = arith.constant dense<0.000000e+00> : vector<2x128xf32>
    %11 = tpu.matmul %9, %10, %cst_8 {dimension_numbers = #tpu.dot_dimension_numbers<[1], [0], [0], [1], [0, 0, 1, 1], [], []>} : vector<2x128xbf16>, vector<128x128xbf16>, vector<2x128xf32> -> vector<2x128xf32>
    %c0_9 = arith.constant 0 : index
    %c0_10 = arith.constant 0 : index
    %12 = vector.load %arg5[%c0_9, %c0_10] : memref<1x128xf32, #tpu.memory_space<vmem>>, vector<1x128xf32>
    %13 = vector.broadcast %12 : vector<1x128xf32> to vector<2x128xf32>
    %14 = arith.addf %11, %13 : vector<2x128xf32>
    %cst_11 = arith.constant 0.000000e+00 : f32
    %15 = vector.broadcast %cst_11 : f32 to vector<2x128xf32>
    %16 = arith.maximumf %14, %15 : vector<2x128xf32>
    %17 = arith.truncf %16 : vector<2x128xf32> to vector<2x128xbf16>
    %c0_12 = arith.constant 0 : index
    %c0_13 = arith.constant 0 : index
    %18 = vector.load %arg6[%c0_12, %c0_13] : memref<128x128xbf16, #tpu.memory_space<vmem>>, vector<128x128xbf16>
    %cst_14 = arith.constant dense<0.000000e+00> : vector<2x128xf32>
    %19 = tpu.matmul %17, %18, %cst_14 {dimension_numbers = #tpu.dot_dimension_numbers<[1], [0], [0], [1], [0, 0, 1, 1], [], []>} : vector<2x128xbf16>, vector<128x128xbf16>, vector<2x128xf32> -> vector<2x128xf32>
    %c0_15 = arith.constant 0 : index
    %c0_16 = arith.constant 0 : index
    %20 = vector.load %arg7[%c0_15, %c0_16] : memref<1x128xf32, #tpu.memory_space<vmem>>, vector<1x128xf32>
    %21 = vector.broadcast %20 : vector<1x128xf32> to vector<2x128xf32>
    %22 = arith.addf %19, %21 : vector<2x128xf32>
    %cst_17 = arith.constant 0.000000e+00 : f32
    %23 = vector.broadcast %cst_17 : f32 to vector<2x128xf32>
    %24 = arith.maximumf %22, %23 : vector<2x128xf32>
    %25 = arith.truncf %24 : vector<2x128xf32> to vector<2x128xbf16>
    %c0_18 = arith.constant 0 : index
    %c0_19 = arith.constant 0 : index
    %26 = vector.load %arg8[%c0_18, %c0_19] : memref<128x4xbf16, #tpu.memory_space<vmem>>, vector<128x4xbf16>
    %cst_20 = arith.constant dense<0.000000e+00> : vector<2x4xf32>
    %27 = tpu.matmul %25, %26, %cst_20 {dimension_numbers = #tpu.dot_dimension_numbers<[1], [0], [0], [1], [0, 0, 1, 1], [], []>} : vector<2x128xbf16>, vector<128x4xbf16>, vector<2x4xf32> -> vector<2x4xf32>
    %c0_21 = arith.constant 0 : index
    %c0_22 = arith.constant 0 : index
    %28 = vector.load %arg9[%c0_21, %c0_22] : memref<1x4xf32, #tpu.memory_space<vmem>>, vector<1x4xf32>
    %29 = vector.broadcast %28 : vector<1x4xf32> to vector<2x4xf32>
    %30 = arith.addf %27, %29 : vector<2x4xf32>
    %c0_23 = arith.constant 0 : index
    %c0_24 = arith.constant 0 : index
    %31 = vector.load %arg10[%c0_23, %c0_24] : memref<2x4xf32, #tpu.memory_space<vmem>>, vector<2x4xf32>
    tpu.vector_store %arg10[%c0_23, %c0_24], %30 {strides = array<i32>} : memref<2x4xf32, #tpu.memory_space<vmem>>, vector<2x4xf32>,
    return
  }
  func.func @transform_0(%arg0: i32) -> (i32, i32) {
    %c0_i32 = arith.constant 0 : i32
    %c0_i32_0 = arith.constant 0 : i32
    return %arg0, %c0_i32 : i32, i32
  }
  func.func @transform_1(%arg0: i32) -> (i32, i32) {
    %c0_i32 = arith.constant 0 : i32
    %c0_i32_0 = arith.constant 0 : i32
    %c0_i32_1 = arith.constant 0 : i32
    return %c0_i32, %c0_i32_0 : i32, i32
  }
  func.func @transform_2(%arg0: i32) -> (i32, i32) {
    %c0_i32 = arith.constant 0 : i32
    %c0_i32_0 = arith.constant 0 : i32
    %c0_i32_1 = arith.constant 0 : i32
    return %c0_i32, %c0_i32_0 : i32, i32
  }
  func.func @transform_3(%arg0: i32) -> (i32, i32) {
    %c0_i32 = arith.constant 0 : i32
    %c0_i32_0 = arith.constant 0 : i32
    %c0_i32_1 = arith.constant 0 : i32
    return %c0_i32, %c0_i32_0 : i32, i32
  }
  func.func @transform_4(%arg0: i32) -> (i32, i32) {
    %c0_i32 = arith.constant 0 : i32
    %c0_i32_0 = arith.constant 0 : i32
    %c0_i32_1 = arith.constant 0 : i32
    return %c0_i32, %c0_i32_0 : i32, i32
  }
  func.func @transform_5(%arg0: i32) -> (i32, i32) {
    %c0_i32 = arith.constant 0 : i32
    %c0_i32_0 = arith.constant 0 : i32
    %c0_i32_1 = arith.constant 0 : i32
    return %c0_i32, %c0_i32_0 : i32, i32
  }
  func.func @transform_6(%arg0: i32) -> (i32, i32) {
    %c0_i32 = arith.constant 0 : i32
    %c0_i32_0 = arith.constant 0 : i32
    %c0_i32_1 = arith.constant 0 : i32
    return %c0_i32, %c0_i32_0 : i32, i32
  }
  func.func @transform_7(%arg0: i32) -> (i32, i32) {
    %c0_i32 = arith.constant 0 : i32
    %c0_i32_0 = arith.constant 0 : i32
    %c0_i32_1 = arith.constant 0 : i32
    return %c0_i32, %c0_i32_0 : i32, i32
  }
  func.func @transform_8(%arg0: i32) -> (i32, i32) {
    %c0_i32 = arith.constant 0 : i32
    %c0_i32_0 = arith.constant 0 : i32
    %c0_i32_1 = arith.constant 0 : i32
    return %c0_i32, %c0_i32_0 : i32, i32
  }
  func.func @transform_9(%arg0: i32) -> (i32, i32) {
    %c0_i32 = arith.constant 0 : i32
    %c0_i32_0 = arith.constant 0 : i32
    return %arg0, %c0_i32 : i32, i32
  }
}

</mosaic_0001>

<llo_original>
// kernel: qnetwork_forward.1
$region0: #{qnetwork_forward.1}
  #allocation0 [shape = 'u32[]', space=smem, size = 0x4, offset = 0x4, fixed_abs, tag = 'smem constant byte address 0x4 - core index']
  #allocation1 [shape = 'u32[144,128]{1,0:T(1,128)}', space=vmem, size = 0x12000, scoped, tag = 'internal scratch']
  %s0 = inlined_call_operand.vmem [shape: f32[2,8], index: 0, kind: input, shape index: {}]
  %s1 = inlined_call_operand.vmem [shape: bf16[8,128], index: 1, kind: input, shape index: {}]
  %s2 = inlined_call_operand.vmem [shape: f32[1,128], index: 2, kind: input, shape index: {}]
  %s3 = inlined_call_operand.vmem [shape: bf16[128,128], index: 3, kind: input, shape index: {}]
  %s4 = inlined_call_operand.vmem [shape: f32[1,128], index: 4, kind: input, shape index: {}]
  %s5 = inlined_call_operand.hbm [shape: bf16[128,128], index: 5, kind: input, shape index: {}]
  %s6 = inlined_call_operand.vmem [shape: f32[1,128], index: 6, kind: input, shape index: {}]
  %s7 = inlined_call_operand.vmem [shape: bf16[128,4], index: 7, kind: input, shape index: {}]
  %s8 = inlined_call_operand.vmem [shape: f32[1,4], index: 8, kind: input, shape index: {}]
  %s9 = inlined_call_operand.hbm [shape: f32[2,4], index: 9, kind: output, shape index: {}]
  %s10 = sld [smem:[#allocation0]]
  $region50: #{qnetwork_forward.1} parent=0
    _
  %s12 = ssub.s32 1, %s10
  %s13 = scalar_select 0, %s12, %s10
  $region1: #{qnetwork_forward.1} parent=0
    #allocation2 [shape = 'u8[32768]{0}', space=vmem, size = 0x8000, scoped, tag = 'input window, operand 5, single buffered']
    #allocation3 [shape = 's32[1]{0}', space=sflag, size = 0x4, scoped, tag = 'scoped memory for qnetwork_forward.1']
    #allocation4 [shape = 's32[1]{0}', space=sflag, size = 0x4, scoped, tag = 'scoped memory for qnetwork_forward.1']
    #allocation5 [shape = 'u8[1024]{0}', space=vmem, size = 0x400, scoped, tag = 'output window, operand 0, single buffered']
    %14 = vsyncpa [#allocation3], 0
    %15 = vsyncpa [#allocation4], 0
    // Predicated region
    $region2: #{qnetwork_forward.1} parent=1 // pred_check
      _
    $region3: #{qnetwork_forward.1} parent=1 // pred_check_branch
      %17 = sbr.rel (0) target = $region5
    $region4: #{qnetwork_forward.1} parent=1 // pred_region
      _
    $region5: #{qnetwork_forward.1} parent=1 // pred_fallthru
      _
    // Predicated region
    $region6: #{qnetwork_forward.1} parent=1 // pred_check
      _
    $region7: #{qnetwork_forward.1} parent=1 // pred_check_branch
      %19 = sbr.rel (0) target = $region9
    $region8: #{qnetwork_forward.1} parent=1 // pred_region
      _
    $region9: #{qnetwork_forward.1} parent=1 // pred_fallthru
      _
    // Predicated region
    $region10: #{qnetwork_forward.1} parent=1 // pred_check
      _
    $region11: #{qnetwork_forward.1} parent=1 // pred_check_branch
      %21 = sbr.rel (0) target = $region13
    $region12: #{qnetwork_forward.1} parent=1 // pred_region
      _
    $region13: #{qnetwork_forward.1} parent=1 // pred_fallthru
      _
    // Predicated region
    $region14: #{qnetwork_forward.1} parent=1 // pred_check
      _
    $region15: #{qnetwork_forward.1} parent=1 // pred_check_branch
      %23 = sbr.rel (0) target = $region17
    $region16: #{qnetwork_forward.1} parent=1 // pred_region
      _
    $region17: #{qnetwork_forward.1} parent=1 // pred_fallthru
      _
    // Predicated region
    $region18: #{qnetwork_forward.1} parent=1 // pred_check
      _
    $region19: #{qnetwork_forward.1} parent=1 // pred_check_branch
      %25 = sbr.rel (0) target = $region21
    $region20: #{qnetwork_forward.1} parent=1 // pred_region
      _
    $region21: #{qnetwork_forward.1} parent=1 // pred_fallthru
      _
    // Predicated region
    $region22: #{qnetwork_forward.1} parent=1 // pred_check
      _
    $region23: #{qnetwork_forward.1} parent=1 // pred_check_branch
      %27 = sbr.rel (0) target = $region25
    $region24: #{qnetwork_forward.1} parent=1 // pred_region
      %s29 = ssub.s32 1024, 1024
      %30 = vsyncadd [#allocation3], %s29
      %s31 = sshll.u32 [#allocation2], 4
      %s32 = int_to_ptr.vmem [resolvable:$true] %s31
      %37 = dma.hbm_to_vmem [thread:$0]  %s5, 1024, %s32, [#allocation3], 64, 64, 4
    $region25: #{qnetwork_forward.1} parent=1 // pred_fallthru
      _
    // Predicated region
    $region26: #{qnetwork_forward.1} parent=1 // pred_check
      _
    $region27: #{qnetwork_forward.1} parent=1 // pred_check_branch
      %39 = sbr.rel (0) target = $region29
    $region28: #{qnetwork_forward.1} parent=1 // pred_region
      _
    $region29: #{qnetwork_forward.1} parent=1 // pred_fallthru
      _
    // Predicated region
    $region30: #{qnetwork_forward.1} parent=1 // pred_check
      _
    $region31: #{qnetwork_forward.1} parent=1 // pred_check_branch
      %41 = sbr.rel (0) target = $region33
    $region32: #{qnetwork_forward.1} parent=1 // pred_region
      _
    $region33: #{qnetwork_forward.1} parent=1 // pred_fallthru
      _
    // Predicated region
    $region34: #{qnetwork_forward.1} parent=1 // pred_check
      _
    $region35: #{qnetwork_forward.1} parent=1 // pred_check_branch
      %43 = sbr.rel (0) target = $region37
    $region36: #{qnetwork_forward.1} parent=1 // pred_region
      _
    $region37: #{qnetwork_forward.1} parent=1 // pred_fallthru
      _
    // Predicated region
    $region38: #{qnetwork_forward.1} parent=1 // pred_check
      _
    $region39: #{qnetwork_forward.1} parent=1 // pred_check_branch
      %45 = sbr.rel (0) target = $region41
    $region40: #{qnetwork_forward.1} parent=1 // pred_region
      %46 = dma.done [#allocation3], 1024
    $region41: #{qnetwork_forward.1} parent=1 // pred_fallthru
      _
    %v48 = vld [vmem:[%s0] sm:$0x3]
    %v49 = vpack.c.bf16 %v48, %v48
    %v50 = vld [vmem:[%s1] sm:$0xf]
    %v51 = vld [vmem:[%s2] sm:$0x1]
    %v53 = vlaneseq
    %v54 = vshrl.u32 %v53, 7
    %v55 = vsub.s32 0, %v54
    %v56 = vrot.slane %v51, %v55
    %vm58 = vcmask 64512
    %v60 = vsel %vm58, %v49, 0
    %vm62 = vcmask 1043456
    %v64 = vsel %vm62, %v50, 0
    %66 = vmatprep.subr.bf16.mxu0 0
    %67 = vmatpush1.bf16.msra.mxu0 0
    %68 = vmatprep.subr.bf16.mxu0 0
    %69 = vmatpush1.bf16.msra.mxu0 0
    %70 = vmatprep.subr.bf16.mxu0 0
    %71 = vmatpush1.bf16.msra.mxu0 0
    %72 = vmatprep.subr.bf16.mxu0 0
    %73 = vmatpush1.bf16.msra.mxu0 0
    %74 = vmatprep.subr.bf16.mxu0 0
    %75 = vmatpush1.bf16.msra.mxu0 0
    %76 = vmatprep.subr.bf16.mxu0 0
    %77 = vmatpush1.bf16.msra.mxu0 0
    %78 = vmatprep.subr.bf16.mxu0 0
    %79 = vmatpush1.bf16.msra.mxu0 0
    %80 = vmatprep.subr.bf16.mxu0 0
    %81 = vmatpush1.bf16.msra.mxu0 %v64
    %82 = vmatprep.subr.bf16.mxu0 0
    %83 = vmatpush2.bf16.msra.mxu0 0
    %84 = vmatprep.subr.bf16.mxu0 0
    %85 = vmatpush2.bf16.msra.mxu0 0
    %86 = vmatprep.subr.bf16.mxu0 0
    %87 = vmatpush2.bf16.msra.mxu0 0
    %88 = vmatprep.subr.bf16.mxu0 0
    %89 = vmatpush2.bf16.msra.mxu0 0
    %90 = vmatprep.subr.bf16.mxu0 0
    %91 = vmatpush2.bf16.msra.mxu0 0
    %92 = vmatprep.subr.bf16.mxu0 0
    %93 = vmatpush2.bf16.msra.mxu0 0
    %94 = vmatprep.subr.bf16.mxu0 0
    %95 = vmatpush2.bf16.msra.mxu0 0
    %96 = vmatprep.subr.bf16.mxu0 0
    %97 = vmatpush2.bf16.msra.mxu0 0
    %98 = vmatprep.mubr.bf16.mxu0 0
    %99 = vmatmul.mubr.bf16.gmra.mxu0 %v60
    %v100 = vpop.f32.mrf.mxu0
    %v101 = vadd.f32 %v56, %v100
    %v102 = vpop.f32.mrf.mxu0
    %v103 = vpop.f32.mrf.mxu0
    %v104 = vpop.f32.mrf.mxu0
    %105 = vdwg.mxu0
    %v106 = vmax.f32 %v101, 0.0
    %v107 = vpack.c.bf16 %v106, %v106
    %v108 = vld [vmem:[%s3] sm:$0xf]
    %v109 = vld [vmem:[%s3 + $0x4] sm:$0xf]
    %v110 = vld [vmem:[%s3 + $0x8] sm:$0xf]
    %v111 = vld [vmem:[%s3 + $0xc] sm:$0xf]
    %v112 = vld [vmem:[%s3 + $0x10] sm:$0xf]
    %v113 = vld [vmem:[%s3 + $0x14] sm:$0xf]
    %v114 = vld [vmem:[%s3 + $0x18] sm:$0xf]
    %v115 = vld [vmem:[%s3 + $0x1c] sm:$0xf]
    %v116 = vld [vmem:[%s3 + $0x20] sm:$0xf]
    %v117 = vld [vmem:[%s3 + $0x24] sm:$0xf]
    %v118 = vld [vmem:[%s3 + $0x28] sm:$0xf]
    %v119 = vld [vmem:[%s3 + $0x2c] sm:$0xf]
    %v120 = vld [vmem:[%s3 + $0x30] sm:$0xf]
    %v121 = vld [vmem:[%s3 + $0x34] sm:$0xf]
    %v122 = vld [vmem:[%s3 + $0x38] sm:$0xf]
    %v123 = vld [vmem:[%s3 + $0x3c] sm:$0xf]
    %v124 = vld [vmem:[%s4] sm:$0x1]
    %v126 = vlaneseq
    %v127 = vshrl.u32 %v126, 7
    %v128 = vsub.s32 0, %v127
    %v129 = vrot.slane %v124, %v128
    %v147 = vunpack.c.l.b16 %v108
    %v148 = vunpack.c.l.b16 %v109
    %v149 = vunpack.c.l.b16 %v110
    %v150 = vunpack.c.l.b16 %v111
    %v151 = vunpack.c.l.b16 %v112
    %v152 = vunpack.c.l.b16 %v113
    %v153 = vunpack.c.l.b16 %v114
    %v154 = vunpack.c.l.b16 %v115
    %v155 = vunpack.c.l.b16 %v116
    %v156 = vunpack.c.l.b16 %v117
    %v157 = vunpack.c.l.b16 %v118
    %v158 = vunpack.c.l.b16 %v119
    %v159 = vunpack.c.l.b16 %v120
    %v160 = vunpack.c.l.b16 %v121
    %v161 = vunpack.c.l.b16 %v122
    %v162 = vunpack.c.l.b16 %v123
    %v163 = vpack.c.b16 %v148, %v147
    %v164 = vpack.c.b16 %v150, %v149
    %v165 = vpack.c.b16 %v152, %v151
    %v166 = vpack.c.b16 %v154, %v153
    %v167 = vpack.c.b16 %v156, %v155
    %v168 = vpack.c.b16 %v158, %v157
    %v169 = vpack.c.b16 %v160, %v159
    %v170 = vpack.c.b16 %v162, %v161
    %179 = vmatprep.subr.bf16.mxu0 0
    %180 = vmatpush1.bf16.msra.mxu0 %v170
    %181 = vmatprep.subr.bf16.mxu0 0
    %182 = vmatpush1.bf16.msra.mxu0 %v169
    %183 = vmatprep.subr.bf16.mxu0 0
    %184 = vmatpush1.bf16.msra.mxu0 %v168
    %185 = vmatprep.subr.bf16.mxu0 0
    %186 = vmatpush1.bf16.msra.mxu0 %v167
    %187 = vmatprep.subr.bf16.mxu0 0
    %188 = vmatpush1.bf16.msra.mxu0 %v166
    %189 = vmatprep.subr.bf16.mxu0 0
    %190 = vmatpush1.bf16.msra.mxu0 %v165
    %191 = vmatprep.subr.bf16.mxu0 0
    %192 = vmatpush1.bf16.msra.mxu0 %v164
    %193 = vmatprep.subr.bf16.mxu0 0
    %194 = vmatpush1.bf16.msra.mxu0 %v163
    %195 = vmatprep.subr.bf16.mxu0 0
    %196 = vmatpush2.bf16.msra.mxu0 0
    %197 = vmatprep.subr.bf16.mxu0 0
    %198 = vmatpush2.bf16.msra.mxu0 0
    %199 = vmatprep.subr.bf16.mxu0 0
    %200 = vmatpush2.bf16.msra.mxu0 0
    %201 = vmatprep.subr.bf16.mxu0 0
    %202 = vmatpush2.bf16.msra.mxu0 0
    %203 = vmatprep.subr.bf16.mxu0 0
    %204 = vmatpush2.bf16.msra.mxu0 0
    %205 = vmatprep.subr.bf16.mxu0 0
    %206 = vmatpush2.bf16.msra.mxu0 0
    %207 = vmatprep.subr.bf16.mxu0 0
    %208 = vmatpush2.bf16.msra.mxu0 0
    %209 = vmatprep.subr.bf16.mxu0 0
    %210 = vmatpush2.bf16.msra.mxu0 0
    %211 = vmatprep.mubr.bf16.mxu0 0
    %212 = vmatmul.mubr.bf16.gmra.mxu0 %v107
    %v213 = vpop.f32.mrf.mxu0
    %v214 = vadd.f32 %v129, %v213
    %v215 = vpop.f32.mrf.mxu0
    %v216 = vpop.f32.mrf.mxu0
    %v217 = vpop.f32.mrf.mxu0
    %218 = vdwg.mxu0
    %v219 = vmax.f32 %v214, 0.0
    %v220 = vpack.c.bf16 %v219, %v219
    %v221 = vld [vmem:[#allocation2] sm:$0xf]
    %v222 = vld [vmem:[#allocation2 + $0x4] sm:$0xf]
    %v223 = vld [vmem:[#allocation2 + $0x8] sm:$0xf]
    %v224 = vld [vmem:[#allocation2 + $0xc] sm:$0xf]
    %v225 = vld [vmem:[#allocation2 + $0x10] sm:$0xf]
    %v226 = vld [vmem:[#allocation2 + $0x14] sm:$0xf]
    %v227 = vld [vmem:[#allocation2 + $0x18] sm:$0xf]
    %v228 = vld [vmem:[#allocation2 + $0x1c] sm:$0xf]
    %v229 = vld [vmem:[#allocation2 + $0x20] sm:$0xf]
    %v230 = vld [vmem:[#allocation2 + $0x24] sm:$0xf]
    %v231 = vld [vmem:[#allocation2 + $0x28] sm:$0xf]
    %v232 = vld [vmem:[#allocation2 + $0x2c] sm:$0xf]
    %v233 = vld [vmem:[#allocation2 + $0x30] sm:$0xf]
    %v234 = vld [vmem:[#allocation2 + $0x34] sm:$0xf]
    %v235 = vld [vmem:[#allocation2 + $0x38] sm:$0xf]
    %v236 = vld [vmem:[#allocation2 + $0x3c] sm:$0xf]
    %v237 = vld [vmem:[%s6] sm:$0x1]
    %v239 = vlaneseq
    %v240 = vshrl.u32 %v239, 7
    %v241 = vsub.s32 0, %v240
    %v242 = vrot.slane %v237, %v241
    %v260 = vunpack.c.l.b16 %v221
    %v261 = vunpack.c.l.b16 %v222
    %v262 = vunpack.c.l.b16 %v223
    %v263 = vunpack.c.l.b16 %v224
    %v264 = vunpack.c.l.b16 %v225
    %v265 = vunpack.c.l.b16 %v226
    %v266 = vunpack.c.l.b16 %v227
    %v267 = vunpack.c.l.b16 %v228
    %v268 = vunpack.c.l.b16 %v229
    %v269 = vunpack.c.l.b16 %v230
    %v270 = vunpack.c.l.b16 %v231
    %v271 = vunpack.c.l.b16 %v232
    %v272 = vunpack.c.l.b16 %v233
    %v273 = vunpack.c.l.b16 %v234
    %v274 = vunpack.c.l.b16 %v235
    %v275 = vunpack.c.l.b16 %v236
    %v276 = vpack.c.b16 %v261, %v260
    %v277 = vpack.c.b16 %v263, %v262
    %v278 = vpack.c.b16 %v265, %v264
    %v279 = vpack.c.b16 %v267, %v266
    %v280 = vpack.c.b16 %v269, %v268
    %v281 = vpack.c.b16 %v271, %v270
    %v282 = vpack.c.b16 %v273, %v272
    %v283 = vpack.c.b16 %v275, %v274
    %292 = vmatprep.subr.bf16.mxu0 0
    %293 = vmatpush1.bf16.msra.mxu0 %v283
    %294 = vmatprep.subr.bf16.mxu0 0
    %295 = vmatpush1.bf16.msra.mxu0 %v282
    %296 = vmatprep.subr.bf16.mxu0 0
    %297 = vmatpush1.bf16.msra.mxu0 %v281
    %298 = vmatprep.subr.bf16.mxu0 0
    %299 = vmatpush1.bf16.msra.mxu0 %v280
    %300 = vmatprep.subr.bf16.mxu0 0
    %301 = vmatpush1.bf16.msra.mxu0 %v279
    %302 = vmatprep.subr.bf16.mxu0 0
    %303 = vmatpush1.bf16.msra.mxu0 %v278
    %304 = vmatprep.subr.bf16.mxu0 0
    %305 = vmatpush1.bf16.msra.mxu0 %v277
    %306 = vmatprep.subr.bf16.mxu0 0
    %307 = vmatpush1.bf16.msra.mxu0 %v276
    %308 = vmatprep.subr.bf16.mxu0 0
    %309 = vmatpush2.bf16.msra.mxu0 0
    %310 = vmatprep.subr.bf16.mxu0 0
    %311 = vmatpush2.bf16.msra.mxu0 0
    %312 = vmatprep.subr.bf16.mxu0 0
    %313 = vmatpush2.bf16.msra.mxu0 0
    %314 = vmatprep.subr.bf16.mxu0 0
    %315 = vmatpush2.bf16.msra.mxu0 0
    %316 = vmatprep.subr.bf16.mxu0 0
    %317 = vmatpush2.bf16.msra.mxu0 0
    %318 = vmatprep.subr.bf16.mxu0 0
    %319 = vmatpush2.bf16.msra.mxu0 0
    %320 = vmatprep.subr.bf16.mxu0 0
    %321 = vmatpush2.bf16.msra.mxu0 0
    %322 = vmatprep.subr.bf16.mxu0 0
    %323 = vmatpush2.bf16.msra.mxu0 0
    %324 = vmatprep.mubr.bf16.mxu0 0
    %325 = vmatmul.mubr.bf16.gmra.mxu0 %v220
    %v326 = vpop.f32.mrf.mxu0
    %v327 = vadd.f32 %v242, %v326
    %v328 = vpop.f32.mrf.mxu0
    %v329 = vpop.f32.mrf.mxu0
    %v330 = vpop.f32.mrf.mxu0
    %331 = vdwg.mxu0
    %v332 = vmax.f32 %v327, 0.0
    %v333 = vpack.c.bf16 %v332, %v332
    %v334 = vld [vmem:[%s7] sm:$0xf]
    %v335 = vld [vmem:[%s7 + $0x4] sm:$0xf]
    %v336 = vld [vmem:[%s7 + $0x8] sm:$0xf]
    %v337 = vld [vmem:[%s7 + $0xc] sm:$0xf]
    %v338 = vld [vmem:[%s7 + $0x10] sm:$0xf]
    %v339 = vld [vmem:[%s7 + $0x14] sm:$0xf]
    %v340 = vld [vmem:[%s7 + $0x18] sm:$0xf]
    %v341 = vld [vmem:[%s7 + $0x1c] sm:$0xf]
    %v342 = vld [vmem:[%s7 + $0x20] sm:$0xf]
    %v343 = vld [vmem:[%s7 + $0x24] sm:$0xf]
    %v344 = vld [vmem:[%s7 + $0x28] sm:$0xf]
    %v345 = vld [vmem:[%s7 + $0x2c] sm:$0xf]
    %v346 = vld [vmem:[%s7 + $0x30] sm:$0xf]
    %v347 = vld [vmem:[%s7 + $0x34] sm:$0xf]
    %v348 = vld [vmem:[%s7 + $0x38] sm:$0xf]
    %v349 = vld [vmem:[%s7 + $0x3c] sm:$0xf]
    %v350 = vld [vmem:[%s8] sm:$0x1]
    %v352 = vlaneseq
    %v353 = vshrl.u32 %v352, 7
    %v354 = vsub.s32 0, %v353
    %v355 = vrot.slane %v350, %v354
    %v373 = vunpack.c.l.b16 %v334
    %v374 = vunpack.c.l.b16 %v335
    %v375 = vunpack.c.l.b16 %v336
    %v376 = vunpack.c.l.b16 %v337
    %v377 = vunpack.c.l.b16 %v338
    %v378 = vunpack.c.l.b16 %v339
    %v379 = vunpack.c.l.b16 %v340
    %v380 = vunpack.c.l.b16 %v341
    %v381 = vunpack.c.l.b16 %v342
    %v382 = vunpack.c.l.b16 %v343
    %v383 = vunpack.c.l.b16 %v344
    %v384 = vunpack.c.l.b16 %v345
    %v385 = vunpack.c.l.b16 %v346
    %v386 = vunpack.c.l.b16 %v347
    %v387 = vunpack.c.l.b16 %v348
    %v388 = vunpack.c.l.b16 %v349
    %v389 = vpack.c.b16 %v374, %v373
    %v390 = vpack.c.b16 %v376, %v375
    %v391 = vpack.c.b16 %v378, %v377
    %v392 = vpack.c.b16 %v380, %v379
    %v393 = vpack.c.b16 %v382, %v381
    %v394 = vpack.c.b16 %v384, %v383
    %v395 = vpack.c.b16 %v386, %v385
    %v396 = vpack.c.b16 %v388, %v387
    %405 = vmatprep.subr.bf16.mxu0 0
    %406 = vmatpush1.bf16.msra.mxu0 %v396
    %407 = vmatprep.subr.bf16.mxu0 0
    %408 = vmatpush1.bf16.msra.mxu0 %v395
    %409 = vmatprep.subr.bf16.mxu0 0
    %410 = vmatpush1.bf16.msra.mxu0 %v394
    %411 = vmatprep.subr.bf16.mxu0 0
    %412 = vmatpush1.bf16.msra.mxu0 %v393
    %413 = vmatprep.subr.bf16.mxu0 0
    %414 = vmatpush1.bf16.msra.mxu0 %v392
    %415 = vmatprep.subr.bf16.mxu0 0
    %416 = vmatpush1.bf16.msra.mxu0 %v391
    %417 = vmatprep.subr.bf16.mxu0 0
    %418 = vmatpush1.bf16.msra.mxu0 %v390
    %419 = vmatprep.subr.bf16.mxu0 0
    %420 = vmatpush1.bf16.msra.mxu0 %v389
    %421 = vmatprep.subr.bf16.mxu0 0
    %422 = vmatpush2.bf16.msra.mxu0 0
    %423 = vmatprep.subr.bf16.mxu0 0
    %424 = vmatpush2.bf16.msra.mxu0 0
    %425 = vmatprep.subr.bf16.mxu0 0
    %426 = vmatpush2.bf16.msra.mxu0 0
    %427 = vmatprep.subr.bf16.mxu0 0
    %428 = vmatpush2.bf16.msra.mxu0 0
    %429 = vmatprep.subr.bf16.mxu0 0
    %430 = vmatpush2.bf16.msra.mxu0 0
    %431 = vmatprep.subr.bf16.mxu0 0
    %432 = vmatpush2.bf16.msra.mxu0 0
    %433 = vmatprep.subr.bf16.mxu0 0
    %434 = vmatpush2.bf16.msra.mxu0 0
    %435 = vmatprep.subr.bf16.mxu0 0
    %436 = vmatpush2.bf16.msra.mxu0 0
    %437 = vmatprep.mubr.bf16.mxu0 0
    %438 = vmatmul.mubr.bf16.gmra.mxu0 %v333
    %v439 = vpop.f32.mrf.mxu0
    %v440 = vadd.f32 %v355, %v439
    %v441 = vpop.f32.mrf.mxu0
    %v442 = vpop.f32.mrf.mxu0
    %v443 = vpop.f32.mrf.mxu0
    %444 = vdwg.mxu0
    %vm445 = vcmask 25600
    %446 = vst.msk [vmem:[#allocation5] sm:$0x3] %vm445, %v440
    // Predicated region
    $region42: #{qnetwork_forward.1} parent=1 // pred_check
      _
    $region43: #{qnetwork_forward.1} parent=1 // pred_check_branch
      %448 = sbr.rel (0) target = $region45
    $region44: #{qnetwork_forward.1} parent=1 // pred_region
      %s450 = ssub.s32 32, 32
      %451 = vsyncadd [#allocation4], %s450
      %s453 = sshll.u32 [#allocation5], 4
      %s454 = int_to_ptr.vmem [resolvable:$true] %s453
      %456 = dma.vmem_to_hbm [thread:$0]  %s454, 32, %s9, [#allocation4]
    $region45: #{qnetwork_forward.1} parent=1 // pred_fallthru
      _
    // Predicated region
    $region46: #{qnetwork_forward.1} parent=1 // pred_check
      _
    $region47: #{qnetwork_forward.1} parent=1 // pred_check_branch
      %458 = sbr.rel (0) target = $region49
    $region48: #{qnetwork_forward.1} parent=1 // pred_region
      %459 = dma.done [#allocation4], 32
    $region49: #{qnetwork_forward.1} parent=1 // pred_fallthru
      _
    %460 = vsyncpa [#allocation3], 1
    %461 = vsyncpa [#allocation4], 1

</llo_original>
